<compile_context>
chip_gen: v6e
topology: v6e:2x2x1
jax: 0.10.0
libtpu: 0.0.40
codegen_flags: <defaults>
</compile_context>

<pallas_src>
import functools

import jax
import jax.numpy as jnp
from jax import lax
from jax.experimental import pallas as pl
from jax.experimental.pallas import tpu as pltpu


def _affine_inner_kernel(x_ref, w1_ref, b1_ref, w2_ref, b2_ref, w3_ref, b3_ref,
                         out_ref, *, B, L, K, P):
    """One block of B batch elements per grid step (everything lane-dense in L).

    x_ref  : (B, Cin, L)    NCL input tile (L on lanes)
    w1_ref : (K, Cin, Cin)  w1_ref[t] = torch_w1[:, :, t]
    b1_ref : (Cin, 1)
    w2_ref : (Cin, Cin)     1x1 conv weights
    b2_ref : (Cin, 1)
    w3_ref : (K, Cout, Cin) w3_ref[t] = torch_w3[:, :, t]
    b3_ref : (Cout, 1)
    out_ref: (B, Cout, L)   NCL output tile (L on lanes)
    """
    # ---- hoisted, grid-step-invariant values (masks + per-tap weights) ----
    lane = lax.broadcasted_iota(jnp.int32, (1, L), 1)
    masks = []
    for t in range(K):
        s = t - P
        if s == 0:
            masks.append(None)
        else:
            masks.append(jnp.logical_and(lane + s >= 0, lane + s < L))

    w1_taps = [w1_ref[t] for t in range(K)]     # (Cin, Cin) each
    w3_taps = [w3_ref[t] for t in range(K)]     # (Cout, Cin) each
    w2 = w2_ref[...]
    b1 = b1_ref[...]
    b2 = b2_ref[...]
    b3 = b3_ref[...]

    def tap_shift(h, t):
        """(C, L) -> same shape; column l holds h[:, l + (t - P)], OOB zeroed."""
        s = t - P
        if s == 0:
            return h
        rolled = pltpu.roll(h, shift=(-s) % L, axis=1)
        return jnp.where(masks[t], rolled, 0.0)

    # Inner loop over batch elements: DMA tile stays big (B elements) while the live
    # compute working set is a single (C, L) slab (bounded vreg residency).
    @pl.loop(0, B)
    def _(b):
        xb = x_ref[b]                                             # (Cin, L)

        # conv1 (kernel K, pad P): K accumulated dots, then ReLU.
        h = b1
        for t in range(K):
            h = h + jnp.dot(w1_taps[t], tap_shift(xb, t),
                            preferred_element_type=jnp.float32)
        h = jnp.maximum(h, 0.0)

        # conv2 (1x1) + ReLU.
        h = jnp.maximum(jnp.dot(w2, h, preferred_element_type=jnp.float32) + b2, 0.0)

        # conv3 (kernel K, pad P): K accumulated dots, no ReLU.
        y = b3
        for t in range(K):
            y = y + jnp.dot(w3_taps[t], tap_shift(h, t),
                            preferred_element_type=jnp.float32)

        out_ref[b] = y.astype(out_ref.dtype)


def _largest_divisor_leq(n, cap):
    cap = max(1, min(n, int(cap)))
    for d in range(cap, 0, -1):
        if n % d == 0:
            return d
    return 1


def affine_inner(x_ncl, params, *, kernel):
    """x_ncl: (N, Cin, L) float32 -> (N, Cout, L) float32 (PyTorch Conv1d semantics)."""
    w1, b1, w2, b2, w3, b3 = params
    N, Cin, L = x_ncl.shape
    K = kernel
    if K % 2 != 1:
        # PyTorch Conv1d with padding=K//2 and even K changes the output length.
        raise NotImplementedError("affine_inner requires an odd kernel size")
    P = K // 2
    Cout = w3.shape[0]

    # One-time weight prep (tiny): per-tap 2-D weight slices + column biases.
    w1_t = jnp.transpose(w1, (2, 0, 1))           # (K, Cin, Cin)
    w2_m = w2[:, :, 0]                            # (Cin, Cin)
    w3_t = jnp.transpose(w3, (2, 0, 1))           # (K, Cout, Cin)
    b1_c = b1.reshape(Cin, 1)
    b2_c = b2.reshape(Cin, 1)
    b3_c = b3.reshape(Cout, 1)

    # ---- generation-aware, bytes-based batch-block sizing ----
    try:
        vmem_phys = int(pltpu.get_tpu_info().vmem_capacity_bytes)
    except Exception:
        vmem_phys = 64 * 1024 * 1024              # conservative (v7x per-core)
    vmem_budget = vmem_phys // 2                  # ~32 MiB on v7x, ~64 MiB on v5e/v6e

    bytes_per_elem = (Cin + Cout) * L * 4         # f32 in + out bytes per batch element
    target_step_bytes = 4 * 1024 * 1024           # ~1-4 MiB of in+out per grid step
    b_cap = max(1, target_step_bytes // bytes_per_elem)
    # Double-buffered in+out tiles plus working-set headroom must fit the budget.
    b_cap = min(b_cap, max(1, (vmem_budget // 3) // (2 * bytes_per_elem)))
    if N >= 2:                                    # keep >= 2 grid steps (v7x: 2 TCs)
        b_cap = min(b_cap, max(1, N // 2))
    B = _largest_divisor_leq(N, b_cap)            # B | N -> no pad / out[:N] slice pass
    # TODO(synk): for awkward prime N, a masked final store beats tiny divisors of N.

    kern = functools.partial(_affine_inner_kernel, B=B, L=L, K=K, P=P)

    flops = 2 * N * L * Cin * (K * Cin + Cin + K * Cout)
    bytes_accessed = 4 * (N * L * (Cin + Cout)
                          + K * Cin * Cin + Cin * Cin + K * Cin * Cout
                          + 2 * Cin + Cout)

    return pl.pallas_call(
        kern,
        out_shape=jax.ShapeDtypeStruct((N, Cout, L), jnp.float32),
        grid_spec=pltpu.PrefetchScalarGridSpec(
            num_scalar_prefetch=0,
            grid=(N // B,),
            in_specs=[
                pl.BlockSpec((B, Cin, L), lambda n: (n, 0, 0)),
                pl.BlockSpec((K, Cin, Cin), lambda n: (0, 0, 0)),
                pl.BlockSpec((Cin, 1), lambda n: (0, 0)),
                pl.BlockSpec((Cin, Cin), lambda n: (0, 0)),
                pl.BlockSpec((Cin, 1), lambda n: (0, 0)),
                pl.BlockSpec((K, Cout, Cin), lambda n: (0, 0, 0)),
                pl.BlockSpec((Cout, 1), lambda n: (0, 0)),
            ],
            out_specs=pl.BlockSpec((B, Cout, L), lambda n: (n, 0, 0)),
        ),
        compiler_params=pltpu.CompilerParams(
            dimension_semantics=("parallel",),    # batch blocks are independent
            vmem_limit_bytes=int(vmem_budget),
        ),
        cost_estimate=pl.CostEstimate(
            flops=int(flops), transcendentals=0, bytes_accessed=int(bytes_accessed)),
    )(x_ncl, w1_t, b1_c, w2_m, b2_c, w3_t, b3_c)


def _reference(x_ncl, params, *, kernel):
    """Pure-JAX reference matching PyTorch Conv1d semantics (cross-correlation)."""
    w1, b1, w2, b2, w3, b3 = params
    P = kernel // 2
    dn = ("NCW", "OIW", "NCW")

    def conv(x, w, b, pad):
        y = lax.conv_general_dilated(x, w, window_strides=(1,), padding=[(pad, pad)],
                                     dimension_numbers=dn,
                                     precision=lax.Precision.HIGHEST)
        return y + b[None, :, None]

    h = jnp.maximum(conv(x_ncl, w1, b1, P), 0.0)
    h = jnp.maximum(conv(h, w2, b2, 0), 0.0)
    return conv(h, w3, b3, P)


if __name__ == "__main__":
    def make_params(key, cin, cout, k):
        ks = jax.random.split(key, 6)
        w1 = jax.random.normal(ks[0], (cin, cin, k), jnp.float32) * 0.2
        b1 = jax.random.normal(ks[1], (cin,), jnp.float32) * 0.1
        w2 = jax.random.normal(ks[2], (cin, cin, 1), jnp.float32) * 0.2
        b2 = jax.random.normal(ks[3], (cin,), jnp.float32) * 0.1
        w3 = jax.random.normal(ks[4], (cout, cin, k), jnp.float32) * 0.2
        b3 = jax.random.normal(ks[5], (cout,), jnp.float32) * 0.1
        return w1, b1, w2, b2, w3, b3

    key = jax.random.PRNGKey(0)

    # Primary small test (shapes implied by the module: N=2, Cin=4, Cout=8, L=16, K=3).
    N, Cin, Cout, L, K = 2, 4, 8, 16, 3
    k0, k1, key = jax.random.split(key, 3)
    params = make_params(k0, Cin, Cout, K)
    x = jax.random.normal(k1, (N, Cin, L), jnp.float32)

    out = jax.block_until_ready(affine_inner(x, params, kernel=K))
    ref = _reference(x, params, kernel=K)
    assert out.shape == (N, Cout, L)
    assert jnp.allclose(out, ref, atol=1e-4, rtol=1e-4), \
        float(jnp.max(jnp.abs(out - ref)))

    # Second small check: lane-dense L, multi-element batch blocks (B=2), K=5.
    N2, Cin2, Cout2, L2, K2 = 4, 4, 8, 256, 5
    k2, k3 = jax.random.split(key)
    params2 = make_params(k2, Cin2, Cout2, K2)
    x2 = jax.random.normal(k3, (N2, Cin2, L2), jnp.float32)

    out2 = jax.block_until_ready(affine_inner(x2, params2, kernel=K2))
    ref2 = _reference(x2, params2, kernel=K2)
    assert out2.shape == (N2, Cout2, L2)
    assert jnp.allclose(out2, ref2, atol=1e-4, rtol=1e-4), \
        float(jnp.max(jnp.abs(out2 - ref2)))

    print("KERNEL_OK")
</pallas_src>

<mosaic_0001>
module attributes {stable_mosaic.version = 11 : i64} {
  func.func @_affine_inner_kernel(%arg0: i32, %arg1: memref<1x4x16xf32, #tpu.memory_space<vmem>>, %arg2: memref<3x4x4xf32, #tpu.memory_space<vmem>>, %arg3: memref<4x1xf32, #tpu.memory_space<vmem>>, %arg4: memref<4x4xf32, #tpu.memory_space<vmem>>, %arg5: memref<4x1xf32, #tpu.memory_space<vmem>>, %arg6: memref<3x8x4xf32, #tpu.memory_space<vmem>>, %arg7: memref<8x1xf32, #tpu.memory_space<vmem>>, %arg8: memref<1x8x16xf32, #tpu.memory_space<vmem>>) attributes {dimension_semantics = [#tpu.dimension_semantics<parallel>], iteration_bounds = array<i64: 2>, scalar_prefetch = 0 : i64, scratch_operands = 0 : i64, tpu.core_type = #tpu.core_type<tc>, window_params = [{transform_indices = @transform_0, window_bounds = array<i64: 1, 4, 16>}, {pipeline_mode = #tpu.pipeline_mode<synchronous>, transform_indices = @transform_1, window_bounds = array<i64: 3, 4, 4>}, {pipeline_mode = #tpu.pipeline_mode<synchronous>, transform_indices = @transform_2, window_bounds = array<i64: 4, 1>}, {pipeline_mode = #tpu.pipeline_mode<synchronous>, transform_indices = @transform_3, window_bounds = array<i64: 4, 4>}, {pipeline_mode = #tpu.pipeline_mode<synchronous>, transform_indices = @transform_4, window_bounds = array<i64: 4, 1>}, {pipeline_mode = #tpu.pipeline_mode<synchronous>, transform_indices = @transform_5, window_bounds = array<i64: 3, 8, 4>}, {pipeline_mode = #tpu.pipeline_mode<synchronous>, transform_indices = @transform_6, window_bounds = array<i64: 8, 1>}, {transform_indices = @transform_7, window_bounds = array<i64: 1, 8, 16>}]} {
    %0 = tpu.iota {dimensions = array<i32: 1>} : vector<1x16xi32>
    %c-1_i32 = arith.constant -1 : i32
    %1 = vector.broadcast %c-1_i32 : i32 to vector<1x16xi32>
    %2 = arith.addi %0, %1 : vector<1x16xi32>
    %c0_i32 = arith.constant 0 : i32
    %3 = vector.broadcast %c0_i32 : i32 to vector<1x16xi32>
    %4 = arith.cmpi sge, %2, %3 : vector<1x16xi32>
    %c-1_i32_0 = arith.constant -1 : i32
    %5 = vector.broadcast %c-1_i32_0 : i32 to vector<1x16xi32>
    %6 = arith.addi %0, %5 : vector<1x16xi32>
    %c16_i32 = arith.constant 16 : i32
    %7 = vector.broadcast %c16_i32 : i32 to vector<1x16xi32>
    %8 = arith.cmpi slt, %6, %7 : vector<1x16xi32>
    %9 = arith.andi %4, %8 : vector<1x16xi1>
    %c1_i32 = arith.constant 1 : i32
    %10 = vector.broadcast %c1_i32 : i32 to vector<1x16xi32>
    %11 = arith.addi %0, %10 : vector<1x16xi32>
    %c0_i32_1 = arith.constant 0 : i32
    %12 = vector.broadcast %c0_i32_1 : i32 to vector<1x16xi32>
    %13 = arith.cmpi sge, %11, %12 : vector<1x16xi32>
    %c1_i32_2 = arith.constant 1 : i32
    %14 = vector.broadcast %c1_i32_2 : i32 to vector<1x16xi32>
    %15 = arith.addi %0, %14 : vector<1x16xi32>
    %c16_i32_3 = arith.constant 16 : i32
    %16 = vector.broadcast %c16_i32_3 : i32 to vector<1x16xi32>
    %17 = arith.cmpi slt, %15, %16 : vector<1x16xi32>
    %18 = arith.andi %13, %17 : vector<1x16xi1>
    %c0 = arith.constant 0 : index
    %c0_4 = arith.constant 0 : index
    %c0_5 = arith.constant 0 : index
    %19 = vector.load %arg2[%c0, %c0_4, %c0_5] : memref<3x4x4xf32, #tpu.memory_space<vmem>>, vector<1x4x4xf32>
    %20 = vector.shape_cast %19 : vector<1x4x4xf32> to vector<4x4xf32>
    %c1 = arith.constant 1 : index
    %c0_6 = arith.constant 0 : index
    %c0_7 = arith.constant 0 : index
    %21 = vector.load %arg2[%c1, %c0_6, %c0_7] : memref<3x4x4xf32, #tpu.memory_space<vmem>>, vector<1x4x4xf32>
    %22 = vector.shape_cast %21 : vector<1x4x4xf32> to vector<4x4xf32>
    %c2 = arith.constant 2 : index
    %c0_8 = arith.constant 0 : index
    %c0_9 = arith.constant 0 : index
    %23 = vector.load %arg2[%c2, %c0_8, %c0_9] : memref<3x4x4xf32, #tpu.memory_space<vmem>>, vector<1x4x4xf32>
    %24 = vector.shape_cast %23 : vector<1x4x4xf32> to vector<4x4xf32>
    %c0_10 = arith.constant 0 : index
    %c0_11 = arith.constant 0 : index
    %c0_12 = arith.constant 0 : index
    %25 = vector.load %arg6[%c0_10, %c0_11, %c0_12] : memref<3x8x4xf32, #tpu.memory_space<vmem>>, vector<1x8x4xf32>
    %26 = vector.shape_cast %25 : vector<1x8x4xf32> to vector<8x4xf32>
    %c1_13 = arith.constant 1 : index
    %c0_14 = arith.constant 0 : index
    %c0_15 = arith.constant 0 : index
    %27 = vector.load %arg6[%c1_13, %c0_14, %c0_15] : memref<3x8x4xf32, #tpu.memory_space<vmem>>, vector<1x8x4xf32>
    %28 = vector.shape_cast %27 : vector<1x8x4xf32> to vector<8x4xf32>
    %c2_16 = arith.constant 2 : index
    %c0_17 = arith.constant 0 : index
    %c0_18 = arith.constant 0 : index
    %29 = vector.load %arg6[%c2_16, %c0_17, %c0_18] : memref<3x8x4xf32, #tpu.memory_space<vmem>>, vector<1x8x4xf32>
    %30 = vector.shape_cast %29 : vector<1x8x4xf32> to vector<8x4xf32>
    %c0_19 = arith.constant 0 : index
    %c0_20 = arith.constant 0 : index
    %31 = vector.load %arg4[%c0_19, %c0_20] : memref<4x4xf32, #tpu.memory_space<vmem>>, vector<4x4xf32>
    %c0_21 = arith.constant 0 : index
    %c0_22 = arith.constant 0 : index
    %32 = vector.load %arg3[%c0_21, %c0_22] : memref<4x1xf32, #tpu.memory_space<vmem>>, vector<4x1xf32>
    %c0_23 = arith.constant 0 : index
    %c0_24 = arith.constant 0 : index
    %33 = vector.load %arg5[%c0_23, %c0_24] : memref<4x1xf32, #tpu.memory_space<vmem>>, vector<4x1xf32>
    %c0_25 = arith.constant 0 : index
    %c0_26 = arith.constant 0 : index
    %34 = vector.load %arg7[%c0_25, %c0_26] : memref<8x1xf32, #tpu.memory_space<vmem>>, vector<8x1xf32>
    %c0_i32_27 = arith.constant 0 : i32
    %c1_i32_28 = arith.constant 1 : i32
    %35 = arith.muli %c0_i32_27, %c1_i32_28 : i32
    %c0_i32_29 = arith.constant 0 : i32
    %36 = arith.addi %c0_i32_29, %35 : i32
    %37 = arith.index_cast %36 : i32 to index
    %c0_30 = arith.constant 0 : index
    %c0_31 = arith.constant 0 : index
    %38 = vector.load %arg1[%37, %c0_30, %c0_31] : memref<1x4x16xf32, #tpu.memory_space<vmem>>, vector<1x4x16xf32>
    %39 = vector.shape_cast %38 : vector<1x4x16xf32> to vector<4x16xf32>
    %c1_i32_32 = arith.constant 1 : i32
    %40 = tpu.dynamic_rotate %39 by %c1_i32_32 dim 1 : vector<4x16xf32>, i32 -> vector<4x16xf32>
    %cst = arith.constant 0.000000e+00 : f32
    %41 = vector.shape_cast %9 : vector<1x16xi1> to vector<1x16xi1>
    %42 = vector.broadcast %41 : vector<1x16xi1> to vector<4x16xi1>
    %43 = vector.broadcast %cst : f32 to vector<4x16xf32>
    %44 = arith.select %42, %40, %43 : vector<4x16xi1>, vector<4x16xf32>
    %cst_33 = arith.constant dense<0.000000e+00> : vector<4x16xf32>
    %45 = tpu.matmul %20, %44, %cst_33 {dimension_numbers = #tpu.dot_dimension_numbers<[1], [0], [0], [1], [0, 0, 1, 1], [], []>} : vector<4x4xf32>, vector<4x16xf32>, vector<4x16xf32> -> vector<4x16xf32>
    %46 = vector.broadcast %32 : vector<4x1xf32> to vector<4x16xf32>
    %47 = arith.addf %46, %45 : vector<4x16xf32>
    %cst_34 = arith.constant dense<0.000000e+00> : vector<4x16xf32>
    %48 = tpu.matmul %22, %39, %cst_34 {dimension_numbers = #tpu.dot_dimension_numbers<[1], [0], [0], [1], [0, 0, 1, 1], [], []>} : vector<4x4xf32>, vector<4x16xf32>, vector<4x16xf32> -> vector<4x16xf32>
    %49 = arith.addf %47, %48 : vector<4x16xf32>
    %c15_i32 = arith.constant 15 : i32
    %50 = tpu.dynamic_rotate %39 by %c15_i32 dim 1 : vector<4x16xf32>, i32 -> vector<4x16xf32>
    %cst_35 = arith.constant 0.000000e+00 : f32
    %51 = vector.shape_cast %18 : vector<1x16xi1> to vector<1x16xi1>
    %52 = vector.broadcast %51 : vector<1x16xi1> to vector<4x16xi1>
    %53 = vector.broadcast %cst_35 : f32 to vector<4x16xf32>
    %54 = arith.select %52, %50, %53 : vector<4x16xi1>, vector<4x16xf32>
    %cst_36 = arith.constant dense<0.000000e+00> : vector<4x16xf32>
    %55 = tpu.matmul %24, %54, %cst_36 {dimension_numbers = #tpu.dot_dimension_numbers<[1], [0], [0], [1], [0, 0, 1, 1], [], []>} : vector<4x4xf32>, vector<4x16xf32>, vector<4x16xf32> -> vector<4x16xf32>
    %56 = arith.addf %49, %55 : vector<4x16xf32>
    %cst_37 = arith.constant 0.000000e+00 : f32
    %57 = vector.broadcast %cst_37 : f32 to vector<4x16xf32>
    %58 = arith.maximumf %56, %57 : vector<4x16xf32>
    %cst_38 = arith.constant dense<0.000000e+00> : vector<4x16xf32>
    %59 = tpu.matmul %31, %58, %cst_38 {dimension_numbers = #tpu.dot_dimension_numbers<[1], [0], [0], [1], [0, 0, 1, 1], [], []>} : vector<4x4xf32>, vector<4x16xf32>, vector<4x16xf32> -> vector<4x16xf32>
    %60 = vector.broadcast %33 : vector<4x1xf32> to vector<4x16xf32>
    %61 = arith.addf %59, %60 : vector<4x16xf32>
    %cst_39 = arith.constant 0.000000e+00 : f32
    %62 = vector.broadcast %cst_39 : f32 to vector<4x16xf32>
    %63 = arith.maximumf %61, %62 : vector<4x16xf32>
    %c1_i32_40 = arith.constant 1 : i32
    %64 = tpu.dynamic_rotate %63 by %c1_i32_40 dim 1 : vector<4x16xf32>, i32 -> vector<4x16xf32>
    %cst_41 = arith.constant 0.000000e+00 : f32
    %65 = vector.shape_cast %9 : vector<1x16xi1> to vector<1x16xi1>
    %66 = vector.broadcast %65 : vector<1x16xi1> to vector<4x16xi1>
    %67 = vector.broadcast %cst_41 : f32 to vector<4x16xf32>
    %68 = arith.select %66, %64, %67 : vector<4x16xi1>, vector<4x16xf32>
    %cst_42 = arith.constant dense<0.000000e+00> : vector<8x16xf32>
    %69 = tpu.matmul %26, %68, %cst_42 {dimension_numbers = #tpu.dot_dimension_numbers<[1], [0], [0], [1], [0, 0, 1, 1], [], []>} : vector<8x4xf32>, vector<4x16xf32>, vector<8x16xf32> -> vector<8x16xf32>
    %70 = vector.broadcast %34 : vector<8x1xf32> to vector<8x16xf32>
    %71 = arith.addf %70, %69 : vector<8x16xf32>
    %cst_43 = arith.constant dense<0.000000e+00> : vector<8x16xf32>
    %72 = tpu.matmul %28, %63, %cst_43 {dimension_numbers = #tpu.dot_dimension_numbers<[1], [0], [0], [1], [0, 0, 1, 1], [], []>} : vector<8x4xf32>, vector<4x16xf32>, vector<8x16xf32> -> vector<8x16xf32>
    %73 = arith.addf %71, %72 : vector<8x16xf32>
    %c15_i32_44 = arith.constant 15 : i32
    %74 = tpu.dynamic_rotate %63 by %c15_i32_44 dim 1 : vector<4x16xf32>, i32 -> vector<4x16xf32>
    %cst_45 = arith.constant 0.000000e+00 : f32
    %75 = vector.shape_cast %18 : vector<1x16xi1> to vector<1x16xi1>
    %76 = vector.broadcast %75 : vector<1x16xi1> to vector<4x16xi1>
    %77 = vector.broadcast %cst_45 : f32 to vector<4x16xf32>
    %78 = arith.select %76, %74, %77 : vector<4x16xi1>, vector<4x16xf32>
    %cst_46 = arith.constant dense<0.000000e+00> : vector<8x16xf32>
    %79 = tpu.matmul %30, %78, %cst_46 {dimension_numbers = #tpu.dot_dimension_numbers<[1], [0], [0], [1], [0, 0, 1, 1], [], []>} : vector<8x4xf32>, vector<4x16xf32>, vector<8x16xf32> -> vector<8x16xf32>
    %80 = arith.addf %73, %79 : vector<8x16xf32>
    %81 = arith.index_cast %36 : i32 to index
    %c0_47 = arith.constant 0 : index
    %c0_48 = arith.constant 0 : index
    %82 = vector.load %arg8[%81, %c0_47, %c0_48] : memref<1x8x16xf32, #tpu.memory_space<vmem>>, vector<1x8x16xf32>
    %83 = vector.shape_cast %82 : vector<1x8x16xf32> to vector<8x16xf32>
    %84 = vector.shape_cast %80 : vector<8x16xf32> to vector<1x8x16xf32>
    tpu.vector_store %arg8[%81, %c0_47, %c0_48], %84 {strides = array<i32>} : memref<1x8x16xf32, #tpu.memory_space<vmem>>, vector<1x8x16xf32>,
    %c1_i32_49 = arith.constant 1 : i32
    return
  }
  func.func @transform_0(%arg0: i32) -> (i32, i32, i32) {
    %c0_i32 = arith.constant 0 : i32
    %c0_i32_0 = arith.constant 0 : i32
    %c0_i32_1 = arith.constant 0 : i32
    return %arg0, %c0_i32, %c0_i32_0 : i32, i32, i32
  }
  func.func @transform_1(%arg0: i32) -> (i32, i32, i32) {
    %c0_i32 = arith.constant 0 : i32
    %c0_i32_0 = arith.constant 0 : i32
    %c0_i32_1 = arith.constant 0 : i32
    %c0_i32_2 = arith.constant 0 : i32
    return %c0_i32, %c0_i32_0, %c0_i32_1 : i32, i32, i32
  }
  func.func @transform_2(%arg0: i32) -> (i32, i32) {
    %c0_i32 = arith.constant 0 : i32
    %c0_i32_0 = arith.constant 0 : i32
    %c0_i32_1 = arith.constant 0 : i32
    return %c0_i32, %c0_i32_0 : i32, i32
  }
  func.func @transform_3(%arg0: i32) -> (i32, i32) {
    %c0_i32 = arith.constant 0 : i32
    %c0_i32_0 = arith.constant 0 : i32
    %c0_i32_1 = arith.constant 0 : i32
    return %c0_i32, %c0_i32_0 : i32, i32
  }
  func.func @transform_4(%arg0: i32) -> (i32, i32) {
    %c0_i32 = arith.constant 0 : i32
    %c0_i32_0 = arith.constant 0 : i32
    %c0_i32_1 = arith.constant 0 : i32
    return %c0_i32, %c0_i32_0 : i32, i32
  }
  func.func @transform_5(%arg0: i32) -> (i32, i32, i32) {
    %c0_i32 = arith.constant 0 : i32
    %c0_i32_0 = arith.constant 0 : i32
    %c0_i32_1 = arith.constant 0 : i32
    %c0_i32_2 = arith.constant 0 : i32
    return %c0_i32, %c0_i32_0, %c0_i32_1 : i32, i32, i32
  }
  func.func @transform_6(%arg0: i32) -> (i32, i32) {
    %c0_i32 = arith.constant 0 : i32
    %c0_i32_0 = arith.constant 0 : i32
    %c0_i32_1 = arith.constant 0 : i32
    return %c0_i32, %c0_i32_0 : i32, i32
  }
  func.func @transform_7(%arg0: i32) -> (i32, i32, i32) {
    %c0_i32 = arith.constant 0 : i32
    %c0_i32_0 = arith.constant 0 : i32
    %c0_i32_1 = arith.constant 0 : i32
    return %arg0, %c0_i32, %c0_i32_0 : i32, i32, i32
  }
}

</mosaic_0001>

<llo_original>
// kernel: tpu_custom_call.1
$region0: #{tpu_custom_call.1}
  #allocation0 [shape = 'u32[]', space=smem, size = 0x4, offset = 0x4, fixed_abs, tag = 'smem constant byte address 0x4 - core index']
  #allocation1 [shape = 'u32[144,128]{1,0:T(1,128)}', space=vmem, size = 0x12000, scoped, tag = 'internal scratch']
  %s0 = inlined_call_operand.vmem [shape: f32[2,4,16], index: 0, kind: input, shape index: {}]
  %s1 = inlined_call_operand.vmem [shape: f32[3,4,4], index: 1, kind: input, shape index: {}]
  %s2 = inlined_call_operand.vmem [shape: f32[4,1], index: 2, kind: input, shape index: {}]
  %s3 = inlined_call_operand.vmem [shape: f32[4,4], index: 3, kind: input, shape index: {}]
  %s4 = inlined_call_operand.vmem [shape: f32[4,1], index: 4, kind: input, shape index: {}]
  %s5 = inlined_call_operand.vmem [shape: f32[3,8,4], index: 5, kind: input, shape index: {}]
  %s6 = inlined_call_operand.vmem [shape: f32[8,1], index: 6, kind: input, shape index: {}]
  %s7 = inlined_call_operand.hbm [shape: f32[2,8,16], index: 7, kind: output, shape index: {}]
  %s8 = sld [smem:[#allocation0]]
  $region61: #{tpu_custom_call.1} parent=0
    _
  %s10 = ssub.s32 1, %s8
  %s11 = scalar_select 0, %s10, %s8
  $region1: #{tpu_custom_call.1} parent=0
    #allocation2 [shape = 'u8[8192]{0}', space=vmem, size = 0x2000, scoped, tag = 'output window, operand 0']
    #allocation3 [shape = 's32[2]{0}', space=sflag, size = 0x8, scoped, tag = 'scoped memory for tpu_custom_call.1']
    %12 = vsyncpa [#allocation3], 0
    %s13 = scalar_lea.sflag [#allocation3], 1
    %14 = vsyncpa %s13, 0
    loop: start=0, step=1, limit=4
    $region2: #{tpu_custom_call.1} parent=1 // loop_pre_header
      _
    $region3: #{tpu_custom_call.1} parent=1 // loop_header
      %s16 = sphi 0, %s20
      %p17 = scmp.ge.s32.totalorder %s16, 4
      %s26 = sphi 0, %s28
      %s29 = sphi 0, %s26
      %s30 = sphi 0, %s29
      %s46 = sphi 0, %s30
      %s50 = sphi 0, %s50
      %s52 = sphi 0, %s50
      %s53 = sphi 0, %s52
      %s67 = sphi 0, %s53
      %s71 = sphi 0, %s71
      %s73 = sphi 0, %s71
      %s74 = sphi 0, %s73
      %s88 = sphi 0, %s74
      %s92 = sphi 0, %s92
      %s94 = sphi 0, %s92
      %s95 = sphi 0, %s94
      %s109 = sphi 0, %s95
      %s113 = sphi 0, %s113
      %s115 = sphi 0, %s113
      %s116 = sphi 0, %s115
      %s130 = sphi 0, %s116
      %s134 = sphi 0, %s134
      %s136 = sphi 0, %s134
      %s137 = sphi 0, %s136
      %s151 = sphi 0, %s137
      %s155 = sphi 0, %s155
      %s157 = sphi 0, %s155
      %s158 = sphi 0, %s157
      %s172 = sphi 0, %s158
      %s178 = sphi 0, %s180
      %s181 = sphi 0, %s178
      %s182 = sphi 0, %s181
      %s198 = sphi 0, %s182
    $region4: #{tpu_custom_call.1} parent=1 // loop_header_branch
      %19 = sbr.rel (%p17) target = $region8
    $region5: #{tpu_custom_call.1} parent=1 // loop_body
      %s21 = ssub.s32 %s16, 1
      %s22 = ssub.s32 %s16, 2
      %s23 = sadd.s32 %s16, 1
      %s24 = ssub.s32 %s16, %s23
      %p25 = scmp.eq.s32.totalorder %s24, 0
      %s27 = sadd.s32 %s26, 1
      %s28 = scalar_select %p25, %s26, %s27
      %p31 = pneg %p25
      %p32 = scmp.eq.s32.totalorder %s16, 1
      %p33 = por %p31, %p32
      %p34 = scmp.ne.s32.totalorder %s26, %s29
      %p35 = scmp.eq.s32.totalorder %s16, 0
      %p36 = por %p34, %p35
      %p37 = scmp.ne.s32.totalorder %s26, %s29
      %p38 = scmp.eq.s32.totalorder %s21, 1
      %p39 = por %p37, %p38
      %p40 = scmp.ne.s32.totalorder %s29, %s30
      %p41 = scmp.eq.s32.totalorder %s21, 0
      %p42 = por %p40, %p41
      %p43 = scmp.ne.s32.totalorder %s29, %s30
      %p44 = scmp.eq.s32.totalorder %s22, 1
      %p45 = por %p43, %p44
      %p47 = scmp.ne.s32.totalorder %s30, %s46
      %p48 = scmp.eq.s32.totalorder %s22, 0
      %p49 = por %p47, %p48
      %s51 = sadd.s32 %s50, 1
      %p54 = scmp.eq.s32.totalorder %s16, 1
      %p55 = scmp.ne.s32.totalorder %s50, %s52
      %p56 = scmp.eq.s32.totalorder %s16, 0
      %p57 = por %p55, %p56
      %p58 = scmp.ne.s32.totalorder %s50, %s52
      %p59 = scmp.eq.s32.totalorder %s21, 1
      %p60 = por %p58, %p59
      %p61 = scmp.ne.s32.totalorder %s52, %s53
      %p62 = scmp.eq.s32.totalorder %s21, 0
      %p63 = por %p61, %p62
      %p64 = scmp.ne.s32.totalorder %s52, %s53
      %p65 = scmp.eq.s32.totalorder %s22, 1
      %p66 = por %p64, %p65
      %p68 = scmp.ne.s32.totalorder %s53, %s67
      %p69 = scmp.eq.s32.totalorder %s22, 0
      %p70 = por %p68, %p69
      %s72 = sadd.s32 %s71, 1
      %p75 = scmp.eq.s32.totalorder %s16, 1
      %p76 = scmp.ne.s32.totalorder %s71, %s73
      %p77 = scmp.eq.s32.totalorder %s16, 0
      %p78 = por %p76, %p77
      %p79 = scmp.ne.s32.totalorder %s71, %s73
      %p80 = scmp.eq.s32.totalorder %s21, 1
      %p81 = por %p79, %p80
      %p82 = scmp.ne.s32.totalorder %s73, %s74
      %p83 = scmp.eq.s32.totalorder %s21, 0
      %p84 = por %p82, %p83
      %p85 = scmp.ne.s32.totalorder %s73, %s74
      %p86 = scmp.eq.s32.totalorder %s22, 1
      %p87 = por %p85, %p86
      %p89 = scmp.ne.s32.totalorder %s74, %s88
      %p90 = scmp.eq.s32.totalorder %s22, 0
      %p91 = por %p89, %p90
      %s93 = sadd.s32 %s92, 1
      %p96 = scmp.eq.s32.totalorder %s16, 1
      %p97 = scmp.ne.s32.totalorder %s92, %s94
      %p98 = scmp.eq.s32.totalorder %s16, 0
      %p99 = por %p97, %p98
      %p100 = scmp.ne.s32.totalorder %s92, %s94
      %p101 = scmp.eq.s32.totalorder %s21, 1
      %p102 = por %p100, %p101
      %p103 = scmp.ne.s32.totalorder %s94, %s95
      %p104 = scmp.eq.s32.totalorder %s21, 0
      %p105 = por %p103, %p104
      %p106 = scmp.ne.s32.totalorder %s94, %s95
      %p107 = scmp.eq.s32.totalorder %s22, 1
      %p108 = por %p106, %p107
      %p110 = scmp.ne.s32.totalorder %s95, %s109
      %p111 = scmp.eq.s32.totalorder %s22, 0
      %p112 = por %p110, %p111
      %s114 = sadd.s32 %s113, 1
      %p117 = scmp.eq.s32.totalorder %s16, 1
      %p118 = scmp.ne.s32.totalorder %s113, %s115
      %p119 = scmp.eq.s32.totalorder %s16, 0
      %p120 = por %p118, %p119
      %p121 = scmp.ne.s32.totalorder %s113, %s115
      %p122 = scmp.eq.s32.totalorder %s21, 1
      %p123 = por %p121, %p122
      %p124 = scmp.ne.s32.totalorder %s115, %s116
      %p125 = scmp.eq.s32.totalorder %s21, 0
      %p126 = por %p124, %p125
      %p127 = scmp.ne.s32.totalorder %s115, %s116
      %p128 = scmp.eq.s32.totalorder %s22, 1
      %p129 = por %p127, %p128
      %p131 = scmp.ne.s32.totalorder %s116, %s130
      %p132 = scmp.eq.s32.totalorder %s22, 0
      %p133 = por %p131, %p132
      %s135 = sadd.s32 %s134, 1
      %p138 = scmp.eq.s32.totalorder %s16, 1
      %p139 = scmp.ne.s32.totalorder %s134, %s136
      %p140 = scmp.eq.s32.totalorder %s16, 0
      %p141 = por %p139, %p140
      %p142 = scmp.ne.s32.totalorder %s134, %s136
      %p143 = scmp.eq.s32.totalorder %s21, 1
      %p144 = por %p142, %p143
      %p145 = scmp.ne.s32.totalorder %s136, %s137
      %p146 = scmp.eq.s32.totalorder %s21, 0
      %p147 = por %p145, %p146
      %p148 = scmp.ne.s32.totalorder %s136, %s137
      %p149 = scmp.eq.s32.totalorder %s22, 1
      %p150 = por %p148, %p149
      %p152 = scmp.ne.s32.totalorder %s137, %s151
      %p153 = scmp.eq.s32.totalorder %s22, 0
      %p154 = por %p152, %p153
      %s156 = sadd.s32 %s155, 1
      %p159 = scmp.eq.s32.totalorder %s16, 1
      %p160 = scmp.ne.s32.totalorder %s155, %s157
      %p161 = scmp.eq.s32.totalorder %s16, 0
      %p162 = por %p160, %p161
      %p163 = scmp.ne.s32.totalorder %s155, %s157
      %p164 = scmp.eq.s32.totalorder %s21, 1
      %p165 = por %p163, %p164
      %p166 = scmp.ne.s32.totalorder %s157, %s158
      %p167 = scmp.eq.s32.totalorder %s21, 0
      %p168 = por %p166, %p167
      %p169 = scmp.ne.s32.totalorder %s157, %s158
      %p170 = scmp.eq.s32.totalorder %s22, 1
      %p171 = por %p169, %p170
      %p173 = scmp.ne.s32.totalorder %s158, %s172
      %p174 = scmp.eq.s32.totalorder %s22, 0
      %p175 = por %p173, %p174
      %s176 = ssub.s32 %s16, %s23
      %p177 = scmp.eq.s32.totalorder %s176, 0
      %s179 = sadd.s32 %s178, 1
      %s180 = scalar_select %p177, %s178, %s179
      %p183 = pneg %p177
      %p184 = scmp.eq.s32.totalorder %s16, 1
      %p185 = por %p183, %p184
      %p186 = scmp.ne.s32.totalorder %s178, %s181
      %p187 = scmp.eq.s32.totalorder %s16, 0
      %p188 = por %p186, %p187
      %p189 = scmp.ne.s32.totalorder %s178, %s181
      %p190 = scmp.eq.s32.totalorder %s21, 1
      %p191 = por %p189, %p190
      %p192 = scmp.ne.s32.totalorder %s181, %s182
      %p193 = scmp.eq.s32.totalorder %s21, 0
      %p194 = por %p192, %p193
      %p195 = scmp.ne.s32.totalorder %s181, %s182
      %p196 = scmp.eq.s32.totalorder %s22, 1
      %p197 = por %p195, %p196
      %p199 = scmp.ne.s32.totalorder %s182, %s198
      %p200 = scmp.eq.s32.totalorder %s22, 0
      %p201 = por %p199, %p200
      %p202 = scmp.le.s32.totalorder 1, %s16
      %p203 = scmp.lt.s32.totalorder %s16, 3
      %p204 = pnand %p202, %p203
      %p205 = pneg %p204
      // Predicated region
      $region9: #{tpu_custom_call.1} parent=5 // pred_check
        _
      $region10: #{tpu_custom_call.1} parent=5 // pred_check_branch
        %207 = sbr.rel (%p204) target = $region12
      $region11: #{tpu_custom_call.1} parent=5 // pred_region
        %s208 = ssub.s32 %s16, 1
        // Predicated region
        $region13: #{tpu_custom_call.1} parent=11 // pred_check
          %p209 = pneg %p63
        $region14: #{tpu_custom_call.1} parent=11 // pred_check_branch
          %211 = sbr.rel (%p209) target = $region16
        $region15: #{tpu_custom_call.1} parent=11 // pred_region
          _
        $region16: #{tpu_custom_call.1} parent=11 // pred_fallthru
          _
        // Predicated region
        $region17: #{tpu_custom_call.1} parent=11 // pred_check
          %p212 = pneg %p84
        $region18: #{tpu_custom_call.1} parent=11 // pred_check_branch
          %214 = sbr.rel (%p212) target = $region20
        $region19: #{tpu_custom_call.1} parent=11 // pred_region
          _
        $region20: #{tpu_custom_call.1} parent=11 // pred_fallthru
          _
        // Predicated region
        $region21: #{tpu_custom_call.1} parent=11 // pred_check
          %p215 = pneg %p105
        $region22: #{tpu_custom_call.1} parent=11 // pred_check_branch
          %217 = sbr.rel (%p215) target = $region24
        $region23: #{tpu_custom_call.1} parent=11 // pred_region
          _
        $region24: #{tpu_custom_call.1} parent=11 // pred_fallthru
          _
        // Predicated region
        $region25: #{tpu_custom_call.1} parent=11 // pred_check
          %p218 = pneg %p126
        $region26: #{tpu_custom_call.1} parent=11 // pred_check_branch
          %220 = sbr.rel (%p218) target = $region28
        $region27: #{tpu_custom_call.1} parent=11 // pred_region
          _
        $region28: #{tpu_custom_call.1} parent=11 // pred_fallthru
          _
        // Predicated region
        $region29: #{tpu_custom_call.1} parent=11 // pred_check
          %p221 = pneg %p147
        $region30: #{tpu_custom_call.1} parent=11 // pred_check_branch
          %223 = sbr.rel (%p221) target = $region32
        $region31: #{tpu_custom_call.1} parent=11 // pred_region
          _
        $region32: #{tpu_custom_call.1} parent=11 // pred_fallthru
          _
        // Predicated region
        $region33: #{tpu_custom_call.1} parent=11 // pred_check
          %p224 = pneg %p168
        $region34: #{tpu_custom_call.1} parent=11 // pred_check_branch
          %226 = sbr.rel (%p224) target = $region36
        $region35: #{tpu_custom_call.1} parent=11 // pred_region
          _
        $region36: #{tpu_custom_call.1} parent=11 // pred_fallthru
          _
      $region12: #{tpu_custom_call.1} parent=5 // pred_fallthru
        _
      %p227 = scmp.lt.s32.totalorder %s16, 2
      // Predicated region
      $region37: #{tpu_custom_call.1} parent=5 // pred_check
        %p228 = pneg %p227
      $region38: #{tpu_custom_call.1} parent=5 // pred_check_branch
        %230 = sbr.rel (%p228) target = $region40
      $region39: #{tpu_custom_call.1} parent=5 // pred_region
        // Predicated region
        $region41: #{tpu_custom_call.1} parent=39 // pred_check
          %p231 = pneg %p36
        $region42: #{tpu_custom_call.1} parent=39 // pred_check_branch
          %233 = sbr.rel (%p231) target = $region44
        $region43: #{tpu_custom_call.1} parent=39 // pred_region
          %p234 = scmp.lt.s32.totalorder %s16, 1
          %s235 = scalar_select %p234, %s16, 1
          %s236 = smul.addr %s235, 4
          %s237 = scalar_lea.vmem %s0, %s236
        $region44: #{tpu_custom_call.1} parent=39 // pred_fallthru
          _
      $region40: #{tpu_custom_call.1} parent=5 // pred_fallthru
        _
      %p238 = scmp.le.s32.totalorder 1, %s16
      %p239 = scmp.lt.s32.totalorder %s16, 3
      %p240 = pnand %p238, %p239
      %p241 = pneg %p240
      // Predicated region
      $region45: #{tpu_custom_call.1} parent=5 // pred_check
        _
      $region46: #{tpu_custom_call.1} parent=5 // pred_check_branch
        %243 = sbr.rel (%p240) target = $region48
      $region47: #{tpu_custom_call.1} parent=5 // pred_region
        %s244 = ssub.s32 %s16, 1
        %p245 = scmp.lt.s32.totalorder %s21, 1
        %s246 = scalar_select %p245, %s21, 1
        %s247 = smul.addr %s246, 4
        %s248 = scalar_lea.vmem %s0, %s247
        %p249 = pneg %p42
        %p250 = pneg %p39
        %p251 = pneg %p63
        %p252 = pneg %p60
        %p253 = pneg %p84
        %p254 = pneg %p81
        %p255 = pneg %p105
        %p256 = pneg %p102
        %p257 = pneg %p126
        %p258 = pneg %p123
        %p259 = pneg %p147
        %p260 = pneg %p144
        %p261 = pneg %p168
        %p262 = pneg %p165
        %p263 = pneg %p194
        %p264 = pneg %p191
        %s265 = sand.u32 %s181, 1
        %s266 = scalar_lea.sflag [#allocation3], %s265
        %s267 = sand.u32 %s181, 1
        %s268 = smul.addr %s267, 8
        %s269 = scalar_lea.vmem [#allocation2], %s268
        %p270 = scmp.lt.s32.totalorder %s21, 1
        %s271 = scalar_select %p270, %s21, 1
        %s272 = smul.addr %s271, 4
        %s273 = scalar_lea.vmem %s0, %s272
        %v274 = vlaneseq
        %v275 = vand.u32 %v274, 127
        %v276 = vadd.s32 %v275, 4294967295
        %vm277 = vcmp.ge.s32.totalorder %v276, 0
        %vm278 = vcmp.lt.s32.totalorder %v276, 16
        %vm279 = vmand %vm277, %vm278
        %v280 = vadd.s32 %v275, 1
        %vm281 = vcmp.ge.s32.totalorder %v280, 0
        %vm282 = vcmp.lt.s32.totalorder %v280, 16
        %vm283 = vmand %vm281, %vm282
        %v284 = vld [vmem:[%s1] sm:$0xf]
        %s285 = scalar_lea.vmem %s1, 4
        %v286 = vld [vmem:[%s285] sm:$0xf]
        %s287 = scalar_lea.vmem %s1, 8
        %v288 = vld [vmem:[%s287] sm:$0xf]
        %v289 = vld [vmem:[%s5] sm:$0xff]
        %s290 = scalar_lea.vmem %s5, 8
        %v291 = vld [vmem:[%s290] sm:$0xff]
        %s292 = scalar_lea.vmem %s5, 16
        %v293 = vld [vmem:[%s292] sm:$0xff]
        %v294 = vld [vmem:[%s3] sm:$0xf]
        %v295 = vld [vmem:[%s2] sm:$0xf]
        %v296 = vld [vmem:[%s4] sm:$0xf]
        %v297 = vld [vmem:[%s6] sm:$0xff]
        %v298 = vld [vmem:[%s273] sm:$0xf]
        %vm299 = vcmask 1047680
        %300 = vrot.lane.b32.xlu0 %v298, 16
        %v301 = vpop.permute.xlu0 %300
        %v302 = vsel %vm299, %v301, %v298
        %303 = vrot.lane.b32.xlu0 %v302, 16
        %v304 = vpop.permute.xlu0 %303
        %v305 = vsel %vm299, %v304, %v298
        %v306 = vsel %vm279, 1, 0
        %vm307 = vcmp.eq.s32.totalorder %v306, 1
        %309 = vrot.lane.b32.xlu0 %v305, 113
        %v310 = vpop.permute.xlu0 %309
        %v312 = vsel %vm307, %v310, 0.0
        %vm313 = vcmask 31744
        %v315 = vsel %vm313, %v284, 0
        %vm317 = vcmask 1043456
        %v319 = vsel %vm317, %v312, 0
        %321 = vmatprep.subr.mxu0 0.0
        %322 = vmatpush1.msra.mxu0 0.0
        %323 = vmatprep.subr.mxu0 0.0
        %324 = vmatpush1.msra.mxu0 0.0
        %325 = vmatprep.subr.mxu0 0.0
        %326 = vmatpush1.msra.mxu0 0.0
        %327 = vmatprep.subr.mxu0 0.0
        %328 = vmatpush1.msra.mxu0 0.0
        %329 = vmatprep.subr.mxu0 0.0
        %330 = vmatpush1.msra.mxu0 0.0
        %331 = vmatprep.subr.mxu0 0.0
        %332 = vmatpush1.msra.mxu0 0.0
        %333 = vmatprep.subr.mxu0 0.0
        %334 = vmatpush1.msra.mxu0 0.0
        %335 = vmatprep.subr.mxu0 0.0
        %336 = vmatpush1.msra.mxu0 0.0
        %337 = vmatprep.subr.mxu0 0.0
        %338 = vmatpush1.msra.mxu0 0.0
        %339 = vmatprep.subr.mxu0 0.0
        %340 = vmatpush1.msra.mxu0 0.0
        %341 = vmatprep.subr.mxu0 0.0
        %342 = vmatpush1.msra.mxu0 0.0
        %343 = vmatprep.subr.mxu0 0.0
        %344 = vmatpush1.msra.mxu0 0.0
        %345 = vmatprep.subr.mxu0 0.0
        %346 = vmatpush1.msra.mxu0 0.0
        %347 = vmatprep.subr.mxu0 0.0
        %348 = vmatpush1.msra.mxu0 0.0
        %349 = vmatprep.subr.mxu0 0.0
        %350 = vmatpush1.msra.mxu0 0.0
        %351 = vmatprep.subr.mxu0 0.0
        %352 = vmatpush1.msra.mxu0 %v319
        %353 = vmatprep.subr.mxu0 0.0
        %354 = vmatpush2.msra.mxu0 0.0
        %355 = vmatprep.subr.mxu0 0.0
        %356 = vmatpush2.msra.mxu0 0.0
        %357 = vmatprep.subr.mxu0 0.0
        %358 = vmatpush2.msra.mxu0 0.0
        %359 = vmatprep.subr.mxu0 0.0
        %360 = vmatpush2.msra.mxu0 0.0
        %361 = vmatprep.subr.mxu0 0.0
        %362 = vmatpush2.msra.mxu0 0.0
        %363 = vmatprep.subr.mxu0 0.0
        %364 = vmatpush2.msra.mxu0 0.0
        %365 = vmatprep.subr.mxu0 0.0
        %366 = vmatpush2.msra.mxu0 0.0
        %367 = vmatprep.subr.mxu0 0.0
        %368 = vmatpush2.msra.mxu0 0.0
        %369 = vmatprep.subr.mxu0 0.0
        %370 = vmatpush2.msra.mxu0 0.0
        %371 = vmatprep.subr.mxu0 0.0
        %372 = vmatpush2.msra.mxu0 0.0
        %373 = vmatprep.subr.mxu0 0.0
        %374 = vmatpush2.msra.mxu0 0.0
        %375 = vmatprep.subr.mxu0 0.0
        %376 = vmatpush2.msra.mxu0 0.0
        %377 = vmatprep.subr.mxu0 0.0
        %378 = vmatpush2.msra.mxu0 0.0
        %379 = vmatprep.subr.mxu0 0.0
        %380 = vmatpush2.msra.mxu0 0.0
        %381 = vmatprep.subr.mxu0 0.0
        %382 = vmatpush2.msra.mxu0 0.0
        %383 = vmatprep.subr.mxu0 0.0
        %384 = vmatpush2.msra.mxu0 0.0
        %385 = vmatprep.mubr.f32.mxu0 0.0
        %386 = vmatmul.mubr.f32.gmra.mxu0 %v315
        %v387 = vpop.f32.mrf.mxu0
        %v388 = vadd.f32 0.0, %v387
        %v389 = vpop.f32.mrf.mxu0
        %390 = vdwg.mxu0
        %392 = vset.pattern.permute.xlu0 0
        %393 = vperm.xlu0 %392, %v295
        %v394 = vpop.permute.xlu0 %393
        %v396 = vadd.f32 %v394, %v388
        %v398 = vsel %vm313, %v286, 0
        %v401 = vsel %vm317, %v298, 0
        %403 = vmatprep.subr.mxu0 0.0
        %404 = vmatpush1.msra.mxu0 0.0
        %405 = vmatprep.subr.mxu0 0.0
        %406 = vmatpush1.msra.mxu0 0.0
        %407 = vmatprep.subr.mxu0 0.0
        %408 = vmatpush1.msra.mxu0 0.0
        %409 = vmatprep.subr.mxu0 0.0
        %410 = vmatpush1.msra.mxu0 0.0
        %411 = vmatprep.subr.mxu0 0.0
        %412 = vmatpush1.msra.mxu0 0.0
        %413 = vmatprep.subr.mxu0 0.0
        %414 = vmatpush1.msra.mxu0 0.0
        %415 = vmatprep.subr.mxu0 0.0
        %416 = vmatpush1.msra.mxu0 0.0
        %417 = vmatprep.subr.mxu0 0.0
        %418 = vmatpush1.msra.mxu0 0.0
        %419 = vmatprep.subr.mxu0 0.0
        %420 = vmatpush1.msra.mxu0 0.0
        %421 = vmatprep.subr.mxu0 0.0
        %422 = vmatpush1.msra.mxu0 0.0
        %423 = vmatprep.subr.mxu0 0.0
        %424 = vmatpush1.msra.mxu0 0.0
        %425 = vmatprep.subr.mxu0 0.0
        %426 = vmatpush1.msra.mxu0 0.0
        %427 = vmatprep.subr.mxu0 0.0
        %428 = vmatpush1.msra.mxu0 0.0
        %429 = vmatprep.subr.mxu0 0.0
        %430 = vmatpush1.msra.mxu0 0.0
        %431 = vmatprep.subr.mxu0 0.0
        %432 = vmatpush1.msra.mxu0 0.0
        %433 = vmatprep.subr.mxu0 0.0
        %434 = vmatpush1.msra.mxu0 %v401
        %435 = vmatprep.subr.mxu0 0.0
        %436 = vmatpush2.msra.mxu0 0.0
        %437 = vmatprep.subr.mxu0 0.0
        %438 = vmatpush2.msra.mxu0 0.0
        %439 = vmatprep.subr.mxu0 0.0
        %440 = vmatpush2.msra.mxu0 0.0
        %441 = vmatprep.subr.mxu0 0.0
        %442 = vmatpush2.msra.mxu0 0.0
        %443 = vmatprep.subr.mxu0 0.0
        %444 = vmatpush2.msra.mxu0 0.0
        %445 = vmatprep.subr.mxu0 0.0
        %446 = vmatpush2.msra.mxu0 0.0
        %447 = vmatprep.subr.mxu0 0.0
        %448 = vmatpush2.msra.mxu0 0.0
        %449 = vmatprep.subr.mxu0 0.0
        %450 = vmatpush2.msra.mxu0 0.0
        %451 = vmatprep.subr.mxu0 0.0
        %452 = vmatpush2.msra.mxu0 0.0
        %453 = vmatprep.subr.mxu0 0.0
        %454 = vmatpush2.msra.mxu0 0.0
        %455 = vmatprep.subr.mxu0 0.0
        %456 = vmatpush2.msra.mxu0 0.0
        %457 = vmatprep.subr.mxu0 0.0
        %458 = vmatpush2.msra.mxu0 0.0
        %459 = vmatprep.subr.mxu0 0.0
        %460 = vmatpush2.msra.mxu0 0.0
        %461 = vmatprep.subr.mxu0 0.0
        %462 = vmatpush2.msra.mxu0 0.0
        %463 = vmatprep.subr.mxu0 0.0
        %464 = vmatpush2.msra.mxu0 0.0
        %465 = vmatprep.subr.mxu0 0.0
        %466 = vmatpush2.msra.mxu0 0.0
        %467 = vmatprep.mubr.f32.mxu0 0.0
        %468 = vmatmul.mubr.f32.gmra.mxu0 %v398
        %v469 = vpop.f32.mrf.mxu0
        %v470 = vadd.f32 0.0, %v469
        %v471 = vpop.f32.mrf.mxu0
        %472 = vdwg.mxu0
        %v473 = vadd.f32 %v396, %v470
        %v474 = vsel %vm283, 1, 0
        %vm475 = vcmp.eq.s32.totalorder %v474, 1
        %476 = vrot.lane.b32.xlu0 %v305, 127
        %v477 = vpop.permute.xlu0 %476
        %v479 = vsel %vm475, %v477, 0.0
        %v481 = vsel %vm313, %v288, 0
        %v484 = vsel %vm317, %v479, 0
        %486 = vmatprep.subr.mxu0 0.0
        %487 = vmatpush1.msra.mxu0 0.0
        %488 = vmatprep.subr.mxu0 0.0
        %489 = vmatpush1.msra.mxu0 0.0
        %490 = vmatprep.subr.mxu0 0.0
        %491 = vmatpush1.msra.mxu0 0.0
        %492 = vmatprep.subr.mxu0 0.0
        %493 = vmatpush1.msra.mxu0 0.0
        %494 = vmatprep.subr.mxu0 0.0
        %495 = vmatpush1.msra.mxu0 0.0
        %496 = vmatprep.subr.mxu0 0.0
        %497 = vmatpush1.msra.mxu0 0.0
        %498 = vmatprep.subr.mxu0 0.0
        %499 = vmatpush1.msra.mxu0 0.0
        %500 = vmatprep.subr.mxu0 0.0
        %501 = vmatpush1.msra.mxu0 0.0
        %502 = vmatprep.subr.mxu0 0.0
        %503 = vmatpush1.msra.mxu0 0.0
        %504 = vmatprep.subr.mxu0 0.0
        %505 = vmatpush1.msra.mxu0 0.0
        %506 = vmatprep.subr.mxu0 0.0
        %507 = vmatpush1.msra.mxu0 0.0
        %508 = vmatprep.subr.mxu0 0.0
        %509 = vmatpush1.msra.mxu0 0.0
        %510 = vmatprep.subr.mxu0 0.0
        %511 = vmatpush1.msra.mxu0 0.0
        %512 = vmatprep.subr.mxu0 0.0
        %513 = vmatpush1.msra.mxu0 0.0
        %514 = vmatprep.subr.mxu0 0.0
        %515 = vmatpush1.msra.mxu0 0.0
        %516 = vmatprep.subr.mxu0 0.0
        %517 = vmatpush1.msra.mxu0 %v484
        %518 = vmatprep.subr.mxu0 0.0
        %519 = vmatpush2.msra.mxu0 0.0
        %520 = vmatprep.subr.mxu0 0.0
        %521 = vmatpush2.msra.mxu0 0.0
        %522 = vmatprep.subr.mxu0 0.0
        %523 = vmatpush2.msra.mxu0 0.0
        %524 = vmatprep.subr.mxu0 0.0
        %525 = vmatpush2.msra.mxu0 0.0
        %526 = vmatprep.subr.mxu0 0.0
        %527 = vmatpush2.msra.mxu0 0.0
        %528 = vmatprep.subr.mxu0 0.0
        %529 = vmatpush2.msra.mxu0 0.0
        %530 = vmatprep.subr.mxu0 0.0
        %531 = vmatpush2.msra.mxu0 0.0
        %532 = vmatprep.subr.mxu0 0.0
        %533 = vmatpush2.msra.mxu0 0.0
        %534 = vmatprep.subr.mxu0 0.0
        %535 = vmatpush2.msra.mxu0 0.0
        %536 = vmatprep.subr.mxu0 0.0
        %537 = vmatpush2.msra.mxu0 0.0
        %538 = vmatprep.subr.mxu0 0.0
        %539 = vmatpush2.msra.mxu0 0.0
        %540 = vmatprep.subr.mxu0 0.0
        %541 = vmatpush2.msra.mxu0 0.0
        %542 = vmatprep.subr.mxu0 0.0
        %543 = vmatpush2.msra.mxu0 0.0
        %544 = vmatprep.subr.mxu0 0.0
        %545 = vmatpush2.msra.mxu0 0.0
        %546 = vmatprep.subr.mxu0 0.0
        %547 = vmatpush2.msra.mxu0 0.0
        %548 = vmatprep.subr.mxu0 0.0
        %549 = vmatpush2.msra.mxu0 0.0
        %550 = vmatprep.mubr.f32.mxu0 0.0
        %551 = vmatmul.mubr.f32.gmra.mxu0 %v481
        %v552 = vpop.f32.mrf.mxu0
        %v553 = vadd.f32 0.0, %v552
        %v554 = vpop.f32.mrf.mxu0
        %555 = vdwg.mxu0
        %v556 = vadd.f32 %v473, %v553
        %v557 = vmax.f32 %v556, 0.0
        %559 = vset.pattern.permute.xlu0 0
        %560 = vperm.xlu0 %559, %v296
        %v561 = vpop.permute.xlu0 %560
        %v564 = vsel %vm313, %v294, 0
        %v567 = vsel %vm317, %v557, 0
        %569 = vmatprep.subr.mxu0 0.0
        %570 = vmatpush1.msra.mxu0 0.0
        %571 = vmatprep.subr.mxu0 0.0
        %572 = vmatpush1.msra.mxu0 0.0
        %573 = vmatprep.subr.mxu0 0.0
        %574 = vmatpush1.msra.mxu0 0.0
        %575 = vmatprep.subr.mxu0 0.0
        %576 = vmatpush1.msra.mxu0 0.0
        %577 = vmatprep.subr.mxu0 0.0
        %578 = vmatpush1.msra.mxu0 0.0
        %579 = vmatprep.subr.mxu0 0.0
        %580 = vmatpush1.msra.mxu0 0.0
        %581 = vmatprep.subr.mxu0 0.0
        %582 = vmatpush1.msra.mxu0 0.0
        %583 = vmatprep.subr.mxu0 0.0
        %584 = vmatpush1.msra.mxu0 0.0
        %585 = vmatprep.subr.mxu0 0.0
        %586 = vmatpush1.msra.mxu0 0.0
        %587 = vmatprep.subr.mxu0 0.0
        %588 = vmatpush1.msra.mxu0 0.0
        %589 = vmatprep.subr.mxu0 0.0
        %590 = vmatpush1.msra.mxu0 0.0
        %591 = vmatprep.subr.mxu0 0.0
        %592 = vmatpush1.msra.mxu0 0.0
        %593 = vmatprep.subr.mxu0 0.0
        %594 = vmatpush1.msra.mxu0 0.0
        %595 = vmatprep.subr.mxu0 0.0
        %596 = vmatpush1.msra.mxu0 0.0
        %597 = vmatprep.subr.mxu0 0.0
        %598 = vmatpush1.msra.mxu0 0.0
        %599 = vmatprep.subr.mxu0 0.0
        %600 = vmatpush1.msra.mxu0 %v567
        %601 = vmatprep.subr.mxu0 0.0
        %602 = vmatpush2.msra.mxu0 0.0
        %603 = vmatprep.subr.mxu0 0.0
        %604 = vmatpush2.msra.mxu0 0.0
        %605 = vmatprep.subr.mxu0 0.0
        %606 = vmatpush2.msra.mxu0 0.0
        %607 = vmatprep.subr.mxu0 0.0
        %608 = vmatpush2.msra.mxu0 0.0
        %609 = vmatprep.subr.mxu0 0.0
        %610 = vmatpush2.msra.mxu0 0.0
        %611 = vmatprep.subr.mxu0 0.0
        %612 = vmatpush2.msra.mxu0 0.0
        %613 = vmatprep.subr.mxu0 0.0
        %614 = vmatpush2.msra.mxu0 0.0
        %615 = vmatprep.subr.mxu0 0.0
        %616 = vmatpush2.msra.mxu0 0.0
        %617 = vmatprep.subr.mxu0 0.0
        %618 = vmatpush2.msra.mxu0 0.0
        %619 = vmatprep.subr.mxu0 0.0
        %620 = vmatpush2.msra.mxu0 0.0
        %621 = vmatprep.subr.mxu0 0.0
        %622 = vmatpush2.msra.mxu0 0.0
        %623 = vmatprep.subr.mxu0 0.0
        %624 = vmatpush2.msra.mxu0 0.0
        %625 = vmatprep.subr.mxu0 0.0
        %626 = vmatpush2.msra.mxu0 0.0
        %627 = vmatprep.subr.mxu0 0.0
        %628 = vmatpush2.msra.mxu0 0.0
        %629 = vmatprep.subr.mxu0 0.0
        %630 = vmatpush2.msra.mxu0 0.0
        %631 = vmatprep.subr.mxu0 0.0
        %632 = vmatpush2.msra.mxu0 0.0
        %633 = vmatprep.mubr.f32.mxu0 0.0
        %634 = vmatmul.mubr.f32.gmra.mxu0 %v564
        %v635 = vpop.f32.mrf.mxu0
        %v636 = vadd.f32 %v561, %v635
        %v637 = vpop.f32.mrf.mxu0
        %638 = vdwg.mxu0
        %v639 = vmax.f32 %v636, 0.0
        %640 = vrot.lane.b32.xlu0 %v639, 16
        %v641 = vpop.permute.xlu0 %640
        %v642 = vsel %vm299, %v641, %v639
        %643 = vrot.lane.b32.xlu0 %v642, 16
        %v644 = vpop.permute.xlu0 %643
        %v645 = vsel %vm299, %v644, %v639
        %647 = vrot.lane.b32.xlu0 %v645, 113
        %v648 = vpop.permute.xlu0 %647
        %v650 = vsel %vm307, %v648, 0.0
        %v652 = vsel %vm313, %v289, 0
        %v655 = vsel %vm317, %v650, 0
        %657 = vmatprep.subr.mxu0 0.0
        %658 = vmatpush1.msra.mxu0 0.0
        %659 = vmatprep.subr.mxu0 0.0
        %660 = vmatpush1.msra.mxu0 0.0
        %661 = vmatprep.subr.mxu0 0.0
        %662 = vmatpush1.msra.mxu0 0.0
        %663 = vmatprep.subr.mxu0 0.0
        %664 = vmatpush1.msra.mxu0 0.0
        %665 = vmatprep.subr.mxu0 0.0
        %666 = vmatpush1.msra.mxu0 0.0
        %667 = vmatprep.subr.mxu0 0.0
        %668 = vmatpush1.msra.mxu0 0.0
        %669 = vmatprep.subr.mxu0 0.0
        %670 = vmatpush1.msra.mxu0 0.0
        %671 = vmatprep.subr.mxu0 0.0
        %672 = vmatpush1.msra.mxu0 0.0
        %673 = vmatprep.subr.mxu0 0.0
        %674 = vmatpush1.msra.mxu0 0.0
        %675 = vmatprep.subr.mxu0 0.0
        %676 = vmatpush1.msra.mxu0 0.0
        %677 = vmatprep.subr.mxu0 0.0
        %678 = vmatpush1.msra.mxu0 0.0
        %679 = vmatprep.subr.mxu0 0.0
        %680 = vmatpush1.msra.mxu0 0.0
        %681 = vmatprep.subr.mxu0 0.0
        %682 = vmatpush1.msra.mxu0 0.0
        %683 = vmatprep.subr.mxu0 0.0
        %684 = vmatpush1.msra.mxu0 0.0
        %685 = vmatprep.subr.mxu0 0.0
        %686 = vmatpush1.msra.mxu0 0.0
        %687 = vmatprep.subr.mxu0 0.0
        %688 = vmatpush1.msra.mxu0 %v655
        %689 = vmatprep.subr.mxu0 0.0
        %690 = vmatpush2.msra.mxu0 0.0
        %691 = vmatprep.subr.mxu0 0.0
        %692 = vmatpush2.msra.mxu0 0.0
        %693 = vmatprep.subr.mxu0 0.0
        %694 = vmatpush2.msra.mxu0 0.0
        %695 = vmatprep.subr.mxu0 0.0
        %696 = vmatpush2.msra.mxu0 0.0
        %697 = vmatprep.subr.mxu0 0.0
        %698 = vmatpush2.msra.mxu0 0.0
        %699 = vmatprep.subr.mxu0 0.0
        %700 = vmatpush2.msra.mxu0 0.0
        %701 = vmatprep.subr.mxu0 0.0
        %702 = vmatpush2.msra.mxu0 0.0
        %703 = vmatprep.subr.mxu0 0.0
        %704 = vmatpush2.msra.mxu0 0.0
        %705 = vmatprep.subr.mxu0 0.0
        %706 = vmatpush2.msra.mxu0 0.0
        %707 = vmatprep.subr.mxu0 0.0
        %708 = vmatpush2.msra.mxu0 0.0
        %709 = vmatprep.subr.mxu0 0.0
        %710 = vmatpush2.msra.mxu0 0.0
        %711 = vmatprep.subr.mxu0 0.0
        %712 = vmatpush2.msra.mxu0 0.0
        %713 = vmatprep.subr.mxu0 0.0
        %714 = vmatpush2.msra.mxu0 0.0
        %715 = vmatprep.subr.mxu0 0.0
        %716 = vmatpush2.msra.mxu0 0.0
        %717 = vmatprep.subr.mxu0 0.0
        %718 = vmatpush2.msra.mxu0 0.0
        %719 = vmatprep.subr.mxu0 0.0
        %720 = vmatpush2.msra.mxu0 0.0
        %721 = vmatprep.mubr.f32.mxu0 0.0
        %722 = vmatmul.mubr.f32.gmra.mxu0 %v652
        %v723 = vpop.f32.mrf.mxu0
        %v724 = vadd.f32 0.0, %v723
        %v725 = vpop.f32.mrf.mxu0
        %726 = vdwg.mxu0
        %728 = vset.pattern.permute.xlu0 0
        %729 = vperm.xlu0 %728, %v297
        %v730 = vpop.permute.xlu0 %729
        %v732 = vadd.f32 %v730, %v724
        %v734 = vsel %vm313, %v291, 0
        %v737 = vsel %vm317, %v639, 0
        %739 = vmatprep.subr.mxu0 0.0
        %740 = vmatpush1.msra.mxu0 0.0
        %741 = vmatprep.subr.mxu0 0.0
        %742 = vmatpush1.msra.mxu0 0.0
        %743 = vmatprep.subr.mxu0 0.0
        %744 = vmatpush1.msra.mxu0 0.0
        %745 = vmatprep.subr.mxu0 0.0
        %746 = vmatpush1.msra.mxu0 0.0
        %747 = vmatprep.subr.mxu0 0.0
        %748 = vmatpush1.msra.mxu0 0.0
        %749 = vmatprep.subr.mxu0 0.0
        %750 = vmatpush1.msra.mxu0 0.0
        %751 = vmatprep.subr.mxu0 0.0
        %752 = vmatpush1.msra.mxu0 0.0
        %753 = vmatprep.subr.mxu0 0.0
        %754 = vmatpush1.msra.mxu0 0.0
        %755 = vmatprep.subr.mxu0 0.0
        %756 = vmatpush1.msra.mxu0 0.0
        %757 = vmatprep.subr.mxu0 0.0
        %758 = vmatpush1.msra.mxu0 0.0
        %759 = vmatprep.subr.mxu0 0.0
        %760 = vmatpush1.msra.mxu0 0.0
        %761 = vmatprep.subr.mxu0 0.0
        %762 = vmatpush1.msra.mxu0 0.0
        %763 = vmatprep.subr.mxu0 0.0
        %764 = vmatpush1.msra.mxu0 0.0
        %765 = vmatprep.subr.mxu0 0.0
        %766 = vmatpush1.msra.mxu0 0.0
        %767 = vmatprep.subr.mxu0 0.0
        %768 = vmatpush1.msra.mxu0 0.0
        %769 = vmatprep.subr.mxu0 0.0
        %770 = vmatpush1.msra.mxu0 %v737
        %771 = vmatprep.subr.mxu0 0.0
        %772 = vmatpush2.msra.mxu0 0.0
        %773 = vmatprep.subr.mxu0 0.0
        %774 = vmatpush2.msra.mxu0 0.0
        %775 = vmatprep.subr.mxu0 0.0
        %776 = vmatpush2.msra.mxu0 0.0
        %777 = vmatprep.subr.mxu0 0.0
        %778 = vmatpush2.msra.mxu0 0.0
        %779 = vmatprep.subr.mxu0 0.0
        %780 = vmatpush2.msra.mxu0 0.0
        %781 = vmatprep.subr.mxu0 0.0
        %782 = vmatpush2.msra.mxu0 0.0
        %783 = vmatprep.subr.mxu0 0.0
        %784 = vmatpush2.msra.mxu0 0.0
        %785 = vmatprep.subr.mxu0 0.0
        %786 = vmatpush2.msra.mxu0 0.0
        %787 = vmatprep.subr.mxu0 0.0
        %788 = vmatpush2.msra.mxu0 0.0
        %789 = vmatprep.subr.mxu0 0.0
        %790 = vmatpush2.msra.mxu0 0.0
        %791 = vmatprep.subr.mxu0 0.0
        %792 = vmatpush2.msra.mxu0 0.0
        %793 = vmatprep.subr.mxu0 0.0
        %794 = vmatpush2.msra.mxu0 0.0
        %795 = vmatprep.subr.mxu0 0.0
        %796 = vmatpush2.msra.mxu0 0.0
        %797 = vmatprep.subr.mxu0 0.0
        %798 = vmatpush2.msra.mxu0 0.0
        %799 = vmatprep.subr.mxu0 0.0
        %800 = vmatpush2.msra.mxu0 0.0
        %801 = vmatprep.subr.mxu0 0.0
        %802 = vmatpush2.msra.mxu0 0.0
        %803 = vmatprep.mubr.f32.mxu0 0.0
        %804 = vmatmul.mubr.f32.gmra.mxu0 %v734
        %v805 = vpop.f32.mrf.mxu0
        %v806 = vadd.f32 0.0, %v805
        %v807 = vpop.f32.mrf.mxu0
        %808 = vdwg.mxu0
        %v809 = vadd.f32 %v732, %v806
        %810 = vrot.lane.b32.xlu0 %v645, 127
        %v811 = vpop.permute.xlu0 %810
        %v813 = vsel %vm475, %v811, 0.0
        %v815 = vsel %vm313, %v293, 0
        %v818 = vsel %vm317, %v813, 0
        %820 = vmatprep.subr.mxu0 0.0
        %821 = vmatpush1.msra.mxu0 0.0
        %822 = vmatprep.subr.mxu0 0.0
        %823 = vmatpush1.msra.mxu0 0.0
        %824 = vmatprep.subr.mxu0 0.0
        %825 = vmatpush1.msra.mxu0 0.0
        %826 = vmatprep.subr.mxu0 0.0
        %827 = vmatpush1.msra.mxu0 0.0
        %828 = vmatprep.subr.mxu0 0.0
        %829 = vmatpush1.msra.mxu0 0.0
        %830 = vmatprep.subr.mxu0 0.0
        %831 = vmatpush1.msra.mxu0 0.0
        %832 = vmatprep.subr.mxu0 0.0
        %833 = vmatpush1.msra.mxu0 0.0
        %834 = vmatprep.subr.mxu0 0.0
        %835 = vmatpush1.msra.mxu0 0.0
        %836 = vmatprep.subr.mxu0 0.0
        %837 = vmatpush1.msra.mxu0 0.0
        %838 = vmatprep.subr.mxu0 0.0
        %839 = vmatpush1.msra.mxu0 0.0
        %840 = vmatprep.subr.mxu0 0.0
        %841 = vmatpush1.msra.mxu0 0.0
        %842 = vmatprep.subr.mxu0 0.0
        %843 = vmatpush1.msra.mxu0 0.0
        %844 = vmatprep.subr.mxu0 0.0
        %845 = vmatpush1.msra.mxu0 0.0
        %846 = vmatprep.subr.mxu0 0.0
        %847 = vmatpush1.msra.mxu0 0.0
        %848 = vmatprep.subr.mxu0 0.0
        %849 = vmatpush1.msra.mxu0 0.0
        %850 = vmatprep.subr.mxu0 0.0
        %851 = vmatpush1.msra.mxu0 %v818
        %852 = vmatprep.subr.mxu0 0.0
        %853 = vmatpush2.msra.mxu0 0.0
        %854 = vmatprep.subr.mxu0 0.0
        %855 = vmatpush2.msra.mxu0 0.0
        %856 = vmatprep.subr.mxu0 0.0
        %857 = vmatpush2.msra.mxu0 0.0
        %858 = vmatprep.subr.mxu0 0.0
        %859 = vmatpush2.msra.mxu0 0.0
        %860 = vmatprep.subr.mxu0 0.0
        %861 = vmatpush2.msra.mxu0 0.0
        %862 = vmatprep.subr.mxu0 0.0
        %863 = vmatpush2.msra.mxu0 0.0
        %864 = vmatprep.subr.mxu0 0.0
        %865 = vmatpush2.msra.mxu0 0.0
        %866 = vmatprep.subr.mxu0 0.0
        %867 = vmatpush2.msra.mxu0 0.0
        %868 = vmatprep.subr.mxu0 0.0
        %869 = vmatpush2.msra.mxu0 0.0
        %870 = vmatprep.subr.mxu0 0.0
        %871 = vmatpush2.msra.mxu0 0.0
        %872 = vmatprep.subr.mxu0 0.0
        %873 = vmatpush2.msra.mxu0 0.0
        %874 = vmatprep.subr.mxu0 0.0
        %875 = vmatpush2.msra.mxu0 0.0
        %876 = vmatprep.subr.mxu0 0.0
        %877 = vmatpush2.msra.mxu0 0.0
        %878 = vmatprep.subr.mxu0 0.0
        %879 = vmatpush2.msra.mxu0 0.0
        %880 = vmatprep.subr.mxu0 0.0
        %881 = vmatpush2.msra.mxu0 0.0
        %882 = vmatprep.subr.mxu0 0.0
        %883 = vmatpush2.msra.mxu0 0.0
        %884 = vmatprep.mubr.f32.mxu0 0.0
        %885 = vmatmul.mubr.f32.gmra.mxu0 %v815
        %v886 = vpop.f32.mrf.mxu0
        %v887 = vadd.f32 0.0, %v886
        %v888 = vpop.f32.mrf.mxu0
        %889 = vdwg.mxu0
        %v890 = vadd.f32 %v809, %v887
        %vm891 = vcmask 130048
        %892 = vst.msk [vmem:[%s269] sm:$0xff] %vm891, %v890
        %s893 = sand.u32 %s181, 1
        %s894 = scalar_lea.sflag [#allocation3], %s893
        %s895 = sand.u32 %s181, 1
        %s896 = smul.addr %s895, 8
        %s897 = scalar_lea.vmem [#allocation2], %s896
        // Predicated region
        $region49: #{tpu_custom_call.1} parent=47 // pred_check
          %p898 = pneg %p191
        $region50: #{tpu_custom_call.1} parent=47 // pred_check_branch
          %900 = sbr.rel (%p898) target = $region52
        $region51: #{tpu_custom_call.1} parent=47 // pred_region
          %s902 = ssub.s32 128, 128
          %903 = vsyncadd %s894, %s902
          %s904 = smul.addr %s21, 128
          %s905 = scalar_lea.hbm %s7, %s904
          %s907 = sshll.u32 %s897, 4
          %s908 = int_to_ptr.vmem [resolvable:$true] %s907
          %910 = dma.vmem_to_hbm [thread:$0]  %s908, 128, %s905, %s894
        $region52: #{tpu_custom_call.1} parent=47 // pred_fallthru
          _
      $region48: #{tpu_custom_call.1} parent=5 // pred_fallthru
        _
      %p911 = scmp.le.s32.totalorder 2, %s16
      // Predicated region
      $region53: #{tpu_custom_call.1} parent=5 // pred_check
        %p912 = pneg %p911
      $region54: #{tpu_custom_call.1} parent=5 // pred_check_branch
        %914 = sbr.rel (%p912) target = $region56
      $region55: #{tpu_custom_call.1} parent=5 // pred_region
        %s915 = ssub.s32 %s16, 2
        // Predicated region
        $region57: #{tpu_custom_call.1} parent=55 // pred_check
          %p916 = pneg %p197
        $region58: #{tpu_custom_call.1} parent=55 // pred_check_branch
          %918 = sbr.rel (%p916) target = $region60
        $region59: #{tpu_custom_call.1} parent=55 // pred_region
          %s919 = sand.u32 %s182, 1
          %s920 = scalar_lea.sflag [#allocation3], %s919
          %s921 = sand.u32 %s182, 1
          %s922 = smul.addr %s921, 8
          %s923 = scalar_lea.vmem [#allocation2], %s922
          %924 = dma.done %s920, 128
        $region60: #{tpu_custom_call.1} parent=55 // pred_fallthru
          _
      $region56: #{tpu_custom_call.1} parent=5 // pred_fallthru
        _
    $region6: #{tpu_custom_call.1} parent=1 // loop_footer
      %s20 = sadd.s32 1, %s16
    $region7: #{tpu_custom_call.1} parent=1 // loop_footer_branch
      %15 = sbr.rel target = $region3
    $region8: #{tpu_custom_call.1} parent=1 // loop_exit
      _
    %925 = vsyncpa [#allocation3], 1
    %s926 = scalar_lea.sflag [#allocation3], 1
    %927 = vsyncpa %s926, 1

</llo_original>
